<compile_context>
chip_gen: v6e
topology: v6e:2x2x1
jax: 0.10.0
libtpu: 0.0.40
codegen_flags: <defaults>
</compile_context>

<pallas_src>
import numpy as np
import jax
import jax.numpy as jnp
from jax.experimental import pallas as pl
from jax.experimental.pallas import tpu as pltpu

KSIZE = 7
PAD = (KSIZE - 1) // 2  # 3


def _spatial_gate_kernel(b_ref, x_ref, k_ref, o_ref):
    # b_ref : SMEM (1,)              effective bias (BN beta/mean folded)
    # x_ref : VMEM (bt, C, HWp)      input block, lanes = flattened (zero-padded) spatial dim
    # k_ref : VMEM (2, HWp, HWp)     masked conv matrices (BN gamma folded), resident
    # o_ref : VMEM (bt, C, HWp)
    C = x_ref.shape[1]

    # ChannelPool: max & mean over C (sublane reduction; lanes stay dense on HWp).
    # Do not keep this read live across the matmul -- x_ref is re-read at the epilogue.
    x_in = x_ref[...]
    cmax = jnp.max(x_in, axis=1).astype(jnp.float32)                      # (bt, HWp)
    cmean = jnp.sum(x_in.astype(jnp.float32), axis=1) * (1.0 / C)         # (bt, HWp)

    # 7x7 "same" conv (2 -> 1) as a single pair of MXU matmuls against the masked conv matrix.
    y = (jnp.dot(cmax, k_ref[0], preferred_element_type=jnp.float32)
         + jnp.dot(cmean, k_ref[1], preferred_element_type=jnp.float32)
         + b_ref[0])                                                      # (bt, HWp)

    scale = jax.nn.sigmoid(y).astype(o_ref.dtype)                         # (bt, HWp)
    o_ref[...] = x_ref[...] * scale[:, None, :]


def spatial_gate(x, conv_w, bn_gamma, bn_beta, bn_mean, bn_var, eps=1e-5,
                 donate_x=False):
    """x: (B, C, H, W) float.  conv_w: (1, 2, 7, 7) OIHW.  BN params: shape (1,).

    Note: parameters are pulled to the host to build the conv matrix (not jit-friendly).
    """
    B, C, H, W = x.shape
    HW = H * W
    HWp = max(128, ((HW + 127) // 128) * 128)   # lane-dense padded spatial length

    # TODO(synk): BatchNorm folded with inference (running-stat) semantics, not
    # PyTorch training-mode batch statistics.
    g_np = np.asarray(bn_gamma, np.float32) / np.sqrt(np.asarray(bn_var, np.float32) + eps)
    w_eff = np.asarray(conv_w, np.float32) * g_np[:, None, None, None]      # (1, 2, 7, 7)
    b_eff = jnp.asarray(
        (np.asarray(bn_beta, np.float32) - np.asarray(bn_mean, np.float32) * g_np)
        .reshape(1), jnp.float32)                                           # (1,)

    # Host-built masked conv matrix: K[c, q, p] = w_eff[0, c, di+3, dj+3] when input flat
    # position q = flat(i+di, j+dj) is valid for output flat position p = flat(i, j).
    # Zero "same" padding at the borders is encoded by simply not writing those entries.
    # TODO(synk): for very large H*W (where 2*HWp*HWp*4 bytes stops fitting VMEM) fall back
    # to a spatially tiled conv matrix or the shift-and-accumulate path.
    ii = np.arange(H)[:, None]
    jj = np.arange(W)[None, :]
    p_flat = ii * W + jj                                                    # (H, W)
    K_np = np.zeros((2, HWp, HWp), np.float32)
    for di in range(-PAD, PAD + 1):
        for dj in range(-PAD, PAD + 1):
            valid = (ii + di >= 0) & (ii + di < H) & (jj + dj >= 0) & (jj + dj < W)
            q_flat = (ii + di) * W + (jj + dj)
            qv = q_flat[valid]
            pv = p_flat[valid]
            K_np[0, qv, pv] += w_eff[0, 0, di + PAD, dj + PAD]
            K_np[1, qv, pv] += w_eff[0, 1, di + PAD, dj + PAD]
    K = jnp.asarray(K_np)                                                   # (2, HWp, HWp)

    # Lane-dense spatial layout; zero-pad the flattened spatial axis to a multiple of 128.
    x2 = x.reshape(B, C, HW)
    if HWp != HW:
        x2 = jnp.pad(x2, ((0, 0), (0, 0), (0, HWp - HW)))

    # Batch packing: target ~2 MiB x blocks (HBM-roofline amortization), but keep at least
    # 2 grid steps so v7x's two TensorCores both get work on the "parallel" batch axis.
    itemsize = jnp.dtype(x2.dtype).itemsize
    per_elem = C * HWp * itemsize
    bt = max(1, min(B, (2 << 20) // max(per_elem, 1)))
    if B >= 2:
        bt = min(bt, (B + 1) // 2)
    while B % bt:
        bt -= 1
    grid = (B // bt,)

    # VMEM budget: in/out double-buffered x blocks + resident conv matrices + f32 temporaries.
    k_bytes = 2 * HWp * HWp * 4
    vmem_need = 4 * bt * per_elem + 2 * k_bytes + 8 * bt * HWp * 4 + (2 << 20)
    try:
        vmem_capacity = pltpu.get_tpu_info().vmem_capacity_bytes
    except Exception:
        vmem_capacity = 64 << 20
    cp = {"dimension_semantics": ("parallel",)}     # batch steps are independent
    if vmem_need > (16 << 20):
        cp["vmem_limit_bytes"] = int(min(vmem_need, (vmem_capacity * 5) // 8))

    out2 = pl.pallas_call(
        _spatial_gate_kernel,
        out_shape=jax.ShapeDtypeStruct((B, C, HWp), x.dtype),
        grid=grid,
        in_specs=[
            pl.BlockSpec(memory_space=pltpu.MemorySpace.SMEM),          # b_eff scalar
            pl.BlockSpec((bt, C, HWp), lambda i: (i, 0, 0)),            # x (lane-dense)
            pl.BlockSpec((2, HWp, HWp), lambda i: (0, 0, 0)),           # conv matrices (resident)
        ],
        out_specs=pl.BlockSpec((bt, C, HWp), lambda i: (i, 0, 0)),
        compiler_params=pltpu.CompilerParams(**cp),
        input_output_aliases=({1: 0} if donate_x else {}),
    )(b_eff, x2, K)

    if HWp != HW:
        out2 = out2[..., :HW]
    return out2.reshape(B, C, H, W)


def spatial_gate_ref(x, conv_w, bn_gamma, bn_beta, bn_mean, bn_var, eps=1e-5):
    """Pure-JAX reference mirroring the PyTorch module (BN in eval mode)."""
    cmax = jnp.max(x, axis=1, keepdims=True)
    cmean = jnp.mean(x, axis=1, keepdims=True)
    comp = jnp.concatenate([cmax, cmean], axis=1)               # (B, 2, H, W)
    y = jax.lax.conv_general_dilated(
        comp, conv_w, window_strides=(1, 1), padding=[(PAD, PAD), (PAD, PAD)],
        dimension_numbers=("NCHW", "OIHW", "NCHW"))             # (B, 1, H, W)
    y = (y - bn_mean) / jnp.sqrt(bn_var + eps) * bn_gamma + bn_beta
    return x * jax.nn.sigmoid(y)


if __name__ == "__main__":
    key = jax.random.PRNGKey(0)
    kx, kw = jax.random.split(key)

    B, C, H, W = 2, 4, 16, 16
    x = jax.random.normal(kx, (B, C, H, W), dtype=jnp.float32)

    conv_w = 0.1 * jax.random.normal(kw, (1, 2, KSIZE, KSIZE), dtype=jnp.float32)
    bn_gamma = jnp.full((1,), 1.2, jnp.float32)
    bn_beta = jnp.full((1,), 0.1, jnp.float32)
    bn_mean = jnp.full((1,), 0.05, jnp.float32)
    bn_var = jnp.full((1,), 0.8, jnp.float32)

    out = spatial_gate(x, conv_w, bn_gamma, bn_beta, bn_mean, bn_var)
    out = jax.block_until_ready(out)

    ref = spatial_gate_ref(x, conv_w, bn_gamma, bn_beta, bn_mean, bn_var)
    assert out.shape == (B, C, H, W)
    assert jnp.allclose(out, ref, atol=1e-4, rtol=1e-4), "mismatch vs JAX reference"

    print("KERNEL_OK")
</pallas_src>

<mosaic_0001>
module attributes {stable_mosaic.version = 11 : i64} {
  func.func @_spatial_gate_kernel(%arg0: i32, %arg1: memref<1xf32, #tpu.memory_space<smem>>, %arg2: memref<1x4x256xf32, #tpu.memory_space<vmem>>, %arg3: memref<2x256x256xf32, #tpu.memory_space<vmem>>, %arg4: memref<1x4x256xf32, #tpu.memory_space<vmem>>) attributes {dimension_semantics = [#tpu.dimension_semantics<parallel>], iteration_bounds = array<i64: 2>, scalar_prefetch = 0 : i64, scratch_operands = 0 : i64, tpu.core_type = #tpu.core_type<tc>, window_params = [{transform_indices = @transform_0, window_bounds = array<i64: 1>}, {transform_indices = @transform_1, window_bounds = array<i64: 1, 4, 256>}, {pipeline_mode = #tpu.pipeline_mode<synchronous>, transform_indices = @transform_2, window_bounds = array<i64: 2, 256, 256>}, {transform_indices = @transform_3, window_bounds = array<i64: 1, 4, 256>}]} {
    %c0 = arith.constant 0 : index
    %c0_0 = arith.constant 0 : index
    %c0_1 = arith.constant 0 : index
    %0 = vector.load %arg2[%c0, %c0_0, %c0_1] : memref<1x4x256xf32, #tpu.memory_space<vmem>>, vector<1x4x256xf32>
    %cst = arith.constant dense<0xFF800000> : vector<1x256xf32>
    %1 = vector.multi_reduction <maximumf>, %0, %cst [1] : vector<1x4x256xf32> to vector<1x256xf32>
    %cst_2 = arith.constant dense<0.000000e+00> : vector<1x256xf32>
    %2 = vector.multi_reduction <add>, %0, %cst_2 [1] : vector<1x4x256xf32> to vector<1x256xf32>
    %cst_3 = arith.constant 2.500000e-01 : f32
    %3 = vector.broadcast %cst_3 : f32 to vector<1x256xf32>
    %4 = arith.mulf %2, %3 : vector<1x256xf32>
    %c0_4 = arith.constant 0 : index
    %c0_5 = arith.constant 0 : index
    %c0_6 = arith.constant 0 : index
    %5 = vector.load %arg3[%c0_4, %c0_5, %c0_6] : memref<2x256x256xf32, #tpu.memory_space<vmem>>, vector<1x256x256xf32>
    %6 = vector.shape_cast %5 : vector<1x256x256xf32> to vector<256x256xf32>
    %cst_7 = arith.constant dense<0.000000e+00> : vector<1x256xf32>
    %7 = tpu.matmul %1, %6, %cst_7 {dimension_numbers = #tpu.dot_dimension_numbers<[1], [0], [0], [1], [0, 0, 1, 1], [], []>} : vector<1x256xf32>, vector<256x256xf32>, vector<1x256xf32> -> vector<1x256xf32>
    %c1 = arith.constant 1 : index
    %c0_8 = arith.constant 0 : index
    %c0_9 = arith.constant 0 : index
    %8 = vector.load %arg3[%c1, %c0_8, %c0_9] : memref<2x256x256xf32, #tpu.memory_space<vmem>>, vector<1x256x256xf32>
    %9 = vector.shape_cast %8 : vector<1x256x256xf32> to vector<256x256xf32>
    %cst_10 = arith.constant dense<0.000000e+00> : vector<1x256xf32>
    %10 = tpu.matmul %4, %9, %cst_10 {dimension_numbers = #tpu.dot_dimension_numbers<[1], [0], [0], [1], [0, 0, 1, 1], [], []>} : vector<1x256xf32>, vector<256x256xf32>, vector<1x256xf32> -> vector<1x256xf32>
    %11 = arith.addf %7, %10 : vector<1x256xf32>
    %c0_11 = arith.constant 0 : index
    %12 = memref.load %arg1[%c0_11] : memref<1xf32, #tpu.memory_space<smem>>
    %13 = vector.broadcast %12 : f32 to vector<1x256xf32>
    %14 = arith.addf %11, %13 : vector<1x256xf32>
    %15 = arith.negf %14 : vector<1x256xf32>
    %16 = math.exp %15 : vector<1x256xf32>
    %cst_12 = arith.constant 1.000000e+00 : f32
    %17 = vector.broadcast %cst_12 : f32 to vector<1x256xf32>
    %18 = arith.addf %17, %16 : vector<1x256xf32>
    %19 = arith.divf %17, %18 : vector<1x256xf32>
    %c0_13 = arith.constant 0 : index
    %c0_14 = arith.constant 0 : index
    %c0_15 = arith.constant 0 : index
    %20 = vector.load %arg2[%c0_13, %c0_14, %c0_15] : memref<1x4x256xf32, #tpu.memory_space<vmem>>, vector<1x4x256xf32>
    %21 = vector.shape_cast %19 : vector<1x256xf32> to vector<1x1x256xf32>
    %22 = vector.broadcast %21 : vector<1x1x256xf32> to vector<1x4x256xf32>
    %23 = arith.mulf %20, %22 : vector<1x4x256xf32>
    %c0_16 = arith.constant 0 : index
    %c0_17 = arith.constant 0 : index
    %c0_18 = arith.constant 0 : index
    %24 = vector.load %arg4[%c0_16, %c0_17, %c0_18] : memref<1x4x256xf32, #tpu.memory_space<vmem>>, vector<1x4x256xf32>
    tpu.vector_store %arg4[%c0_16, %c0_17, %c0_18], %23 {strides = array<i32>} : memref<1x4x256xf32, #tpu.memory_space<vmem>>, vector<1x4x256xf32>,
    return
  }
  func.func @transform_0(%arg0: i32) -> i32 {
    %c0_i32 = arith.constant 0 : i32
    %c0_i32_0 = arith.constant 0 : i32
    return %c0_i32 : i32
  }
  func.func @transform_1(%arg0: i32) -> (i32, i32, i32) {
    %c0_i32 = arith.constant 0 : i32
    %c0_i32_0 = arith.constant 0 : i32
    %c0_i32_1 = arith.constant 0 : i32
    return %arg0, %c0_i32, %c0_i32_0 : i32, i32, i32
  }
  func.func @transform_2(%arg0: i32) -> (i32, i32, i32) {
    %c0_i32 = arith.constant 0 : i32
    %c0_i32_0 = arith.constant 0 : i32
    %c0_i32_1 = arith.constant 0 : i32
    %c0_i32_2 = arith.constant 0 : i32
    return %c0_i32, %c0_i32_0, %c0_i32_1 : i32, i32, i32
  }
  func.func @transform_3(%arg0: i32) -> (i32, i32, i32) {
    %c0_i32 = arith.constant 0 : i32
    %c0_i32_0 = arith.constant 0 : i32
    %c0_i32_1 = arith.constant 0 : i32
    return %arg0, %c0_i32, %c0_i32_0 : i32, i32, i32
  }
}

</mosaic_0001>

<llo_original>
// kernel: tpu_custom_call.1
$region0: #{tpu_custom_call.1}
  #allocation0 [shape = 'u32[]', space=smem, size = 0x4, offset = 0x4, fixed_abs, tag = 'smem constant byte address 0x4 - core index']
  #allocation1 [shape = 'u32[144,128]{1,0:T(1,128)}', space=vmem, size = 0x12000, scoped, tag = 'internal scratch']
  #allocation2 [shape = 'f32[1]{0:T(128)S(6)}', space=smem, size = 0x200, scoped, tag = 'scoped memory for tpu_custom_call.1']
  %s0 = inlined_call_operand.<no memory space> [shape: f32[1], index: 0, kind: input, shape index: {}]
  %s1 = inlined_call_operand.hbm [shape: f32[2,4,256], index: 1, kind: input, shape index: {}]
  %s2 = inlined_call_operand.hbm [shape: f32[2,256,256], index: 2, kind: input, shape index: {}]
  %s3 = inlined_call_operand.hbm [shape: f32[2,4,256], index: 3, kind: output, shape index: {}]
  %s4 = sld [smem:[#allocation0]]
  $region53: #{tpu_custom_call.1} parent=0
    _
  %s6 = ssub.s32 1, %s4
  %s7 = scalar_select 0, %s6, %s4
  %8 = sst [smem:[#allocation2]] %s0
  $region1: #{tpu_custom_call.1} parent=0
    #allocation3 [shape = 'u8[8192]{0}', space=vmem, size = 0x2000, scoped, tag = 'input window, operand 1']
    #allocation4 [shape = 's32[2]{0}', space=sflag, size = 0x8, scoped, tag = 'scoped memory for tpu_custom_call.1']
    #allocation5 [shape = 's32[2]{0}', space=sflag, size = 0x8, scoped, tag = 'scoped memory for tpu_custom_call.1']
    #allocation6 [shape = 'u8[524288]{0}', space=vmem, size = 0x80000, scoped, tag = 'input window, operand 2, single buffered']
    #allocation7 [shape = 's32[1]{0}', space=sflag, size = 0x4, scoped, tag = 'scoped memory for tpu_custom_call.1']
    #allocation8 [shape = 'u8[8192]{0}', space=vmem, size = 0x2000, scoped, tag = 'output window, operand 0']
    %9 = vsyncpa [#allocation4], 0
    %s10 = scalar_lea.sflag [#allocation4], 1
    %11 = vsyncpa %s10, 0
    %12 = vsyncpa [#allocation7], 0
    %13 = vsyncpa [#allocation5], 0
    %s14 = scalar_lea.sflag [#allocation5], 1
    %15 = vsyncpa %s14, 0
    loop: start=0, step=1, limit=4
    $region2: #{tpu_custom_call.1} parent=1 // loop_pre_header
      _
    $region3: #{tpu_custom_call.1} parent=1 // loop_header
      %s17 = sphi 0, %s21
      %p18 = scmp.ge.s32.totalorder %s17, 4
      %s25 = sphi 0, %s25
      %s27 = sphi 0, %s25
      %s28 = sphi 0, %s27
      %s42 = sphi 0, %s28
      %s48 = sphi 0, %s50
      %s51 = sphi 0, %s48
      %s52 = sphi 0, %s51
      %s68 = sphi 0, %s52
      %s72 = sphi 0, %s72
      %s74 = sphi 0, %s72
      %s75 = sphi 0, %s74
      %s89 = sphi 0, %s75
      %s95 = sphi 0, %s97
      %s98 = sphi 0, %s95
      %s99 = sphi 0, %s98
      %s115 = sphi 0, %s99
    $region4: #{tpu_custom_call.1} parent=1 // loop_header_branch
      %20 = sbr.rel (%p18) target = $region8
    $region5: #{tpu_custom_call.1} parent=1 // loop_body
      %s22 = ssub.s32 %s17, 1
      %s23 = ssub.s32 %s17, 2
      %s24 = sadd.s32 %s17, 1
      %s26 = sadd.s32 %s25, 1
      %p29 = scmp.eq.s32.totalorder %s17, 1
      %p30 = scmp.ne.s32.totalorder %s25, %s27
      %p31 = scmp.eq.s32.totalorder %s17, 0
      %p32 = por %p30, %p31
      %p33 = scmp.ne.s32.totalorder %s25, %s27
      %p34 = scmp.eq.s32.totalorder %s22, 1
      %p35 = por %p33, %p34
      %p36 = scmp.ne.s32.totalorder %s27, %s28
      %p37 = scmp.eq.s32.totalorder %s22, 0
      %p38 = por %p36, %p37
      %p39 = scmp.ne.s32.totalorder %s27, %s28
      %p40 = scmp.eq.s32.totalorder %s23, 1
      %p41 = por %p39, %p40
      %p43 = scmp.ne.s32.totalorder %s28, %s42
      %p44 = scmp.eq.s32.totalorder %s23, 0
      %p45 = por %p43, %p44
      %s46 = ssub.s32 %s17, %s24
      %p47 = scmp.eq.s32.totalorder %s46, 0
      %s49 = sadd.s32 %s48, 1
      %s50 = scalar_select %p47, %s48, %s49
      %p53 = pneg %p47
      %p54 = scmp.eq.s32.totalorder %s17, 1
      %p55 = por %p53, %p54
      %p56 = scmp.ne.s32.totalorder %s48, %s51
      %p57 = scmp.eq.s32.totalorder %s17, 0
      %p58 = por %p56, %p57
      %p59 = scmp.ne.s32.totalorder %s48, %s51
      %p60 = scmp.eq.s32.totalorder %s22, 1
      %p61 = por %p59, %p60
      %p62 = scmp.ne.s32.totalorder %s51, %s52
      %p63 = scmp.eq.s32.totalorder %s22, 0
      %p64 = por %p62, %p63
      %p65 = scmp.ne.s32.totalorder %s51, %s52
      %p66 = scmp.eq.s32.totalorder %s23, 1
      %p67 = por %p65, %p66
      %p69 = scmp.ne.s32.totalorder %s52, %s68
      %p70 = scmp.eq.s32.totalorder %s23, 0
      %p71 = por %p69, %p70
      %s73 = sadd.s32 %s72, 1
      %p76 = scmp.eq.s32.totalorder %s17, 1
      %p77 = scmp.ne.s32.totalorder %s72, %s74
      %p78 = scmp.eq.s32.totalorder %s17, 0
      %p79 = por %p77, %p78
      %p80 = scmp.ne.s32.totalorder %s72, %s74
      %p81 = scmp.eq.s32.totalorder %s22, 1
      %p82 = por %p80, %p81
      %p83 = scmp.ne.s32.totalorder %s74, %s75
      %p84 = scmp.eq.s32.totalorder %s22, 0
      %p85 = por %p83, %p84
      %p86 = scmp.ne.s32.totalorder %s74, %s75
      %p87 = scmp.eq.s32.totalorder %s23, 1
      %p88 = por %p86, %p87
      %p90 = scmp.ne.s32.totalorder %s75, %s89
      %p91 = scmp.eq.s32.totalorder %s23, 0
      %p92 = por %p90, %p91
      %s93 = ssub.s32 %s17, %s24
      %p94 = scmp.eq.s32.totalorder %s93, 0
      %s96 = sadd.s32 %s95, 1
      %s97 = scalar_select %p94, %s95, %s96
      %p100 = pneg %p94
      %p101 = scmp.eq.s32.totalorder %s17, 1
      %p102 = por %p100, %p101
      %p103 = scmp.ne.s32.totalorder %s95, %s98
      %p104 = scmp.eq.s32.totalorder %s17, 0
      %p105 = por %p103, %p104
      %p106 = scmp.ne.s32.totalorder %s95, %s98
      %p107 = scmp.eq.s32.totalorder %s22, 1
      %p108 = por %p106, %p107
      %p109 = scmp.ne.s32.totalorder %s98, %s99
      %p110 = scmp.eq.s32.totalorder %s22, 0
      %p111 = por %p109, %p110
      %p112 = scmp.ne.s32.totalorder %s98, %s99
      %p113 = scmp.eq.s32.totalorder %s23, 1
      %p114 = por %p112, %p113
      %p116 = scmp.ne.s32.totalorder %s99, %s115
      %p117 = scmp.eq.s32.totalorder %s23, 0
      %p118 = por %p116, %p117
      %p119 = scmp.le.s32.totalorder 1, %s17
      %p120 = scmp.lt.s32.totalorder %s17, 3
      %p121 = pnand %p119, %p120
      %p122 = pneg %p121
      // Predicated region
      $region9: #{tpu_custom_call.1} parent=5 // pred_check
        _
      $region10: #{tpu_custom_call.1} parent=5 // pred_check_branch
        %124 = sbr.rel (%p121) target = $region12
      $region11: #{tpu_custom_call.1} parent=5 // pred_region
        %s125 = ssub.s32 %s17, 1
        // Predicated region
        $region13: #{tpu_custom_call.1} parent=11 // pred_check
          %p126 = pneg %p38
        $region14: #{tpu_custom_call.1} parent=11 // pred_check_branch
          %128 = sbr.rel (%p126) target = $region16
        $region15: #{tpu_custom_call.1} parent=11 // pred_region
          _
        $region16: #{tpu_custom_call.1} parent=11 // pred_fallthru
          _
        // Predicated region
        $region17: #{tpu_custom_call.1} parent=11 // pred_check
          %p129 = pneg %p85
        $region18: #{tpu_custom_call.1} parent=11 // pred_check_branch
          %131 = sbr.rel (%p129) target = $region20
        $region19: #{tpu_custom_call.1} parent=11 // pred_region
          %s133 = ssub.s32 16384, 16384
          %134 = vsyncadd [#allocation7], %s133
          %s135 = sshll.u32 [#allocation6], 4
          %s136 = int_to_ptr.vmem [resolvable:$true] %s135
          %141 = dma.hbm_to_vmem [thread:$0]  %s2, 16384, %s136, [#allocation7], 256, 256, 16
        $region20: #{tpu_custom_call.1} parent=11 // pred_fallthru
          _
      $region12: #{tpu_custom_call.1} parent=5 // pred_fallthru
        _
      %p142 = scmp.lt.s32.totalorder %s17, 2
      // Predicated region
      $region21: #{tpu_custom_call.1} parent=5 // pred_check
        %p143 = pneg %p142
      $region22: #{tpu_custom_call.1} parent=5 // pred_check_branch
        %145 = sbr.rel (%p143) target = $region24
      $region23: #{tpu_custom_call.1} parent=5 // pred_region
        // Predicated region
        $region25: #{tpu_custom_call.1} parent=23 // pred_check
          %p146 = pneg %p58
        $region26: #{tpu_custom_call.1} parent=23 // pred_check_branch
          %148 = sbr.rel (%p146) target = $region28
        $region27: #{tpu_custom_call.1} parent=23 // pred_region
          %s149 = sand.u32 %s48, 1
          %s150 = scalar_lea.sflag [#allocation4], %s149
          %s151 = sand.u32 %s48, 1
          %s152 = smul.addr %s151, 8
          %s153 = scalar_lea.vmem [#allocation3], %s152
          %s155 = ssub.s32 128, 128
          %156 = vsyncadd %s150, %s155
          %s157 = smul.addr %s17, 2
          %s158 = smul.addr %s157, 64
          %s159 = scalar_lea.hbm %s1, %s158
          %s161 = sshll.u32 %s153, 4
          %s162 = int_to_ptr.vmem [resolvable:$true] %s161
          %164 = dma.hbm_to_vmem [thread:$0]  %s159, 128, %s162, %s150
        $region28: #{tpu_custom_call.1} parent=23 // pred_fallthru
          _
      $region24: #{tpu_custom_call.1} parent=5 // pred_fallthru
        _
      %p165 = scmp.le.s32.totalorder 1, %s17
      %p166 = scmp.lt.s32.totalorder %s17, 3
      %p167 = pnand %p165, %p166
      %p168 = pneg %p167
      // Predicated region
      $region29: #{tpu_custom_call.1} parent=5 // pred_check
        _
      $region30: #{tpu_custom_call.1} parent=5 // pred_check_branch
        %170 = sbr.rel (%p167) target = $region32
      $region31: #{tpu_custom_call.1} parent=5 // pred_region
        %s171 = ssub.s32 %s17, 1
        %s172 = sand.u32 %s51, 1
        %s173 = scalar_lea.sflag [#allocation4], %s172
        %s174 = sand.u32 %s51, 1
        %s175 = smul.addr %s174, 8
        %s176 = scalar_lea.vmem [#allocation3], %s175
        // Predicated region
        $region33: #{tpu_custom_call.1} parent=31 // pred_check
          %p177 = pneg %p64
        $region34: #{tpu_custom_call.1} parent=31 // pred_check_branch
          %179 = sbr.rel (%p177) target = $region36
        $region35: #{tpu_custom_call.1} parent=31 // pred_region
          %180 = dma.done %s173, 128
        $region36: #{tpu_custom_call.1} parent=31 // pred_fallthru
          _
        // Predicated region
        $region37: #{tpu_custom_call.1} parent=31 // pred_check
          %p181 = pneg %p85
        $region38: #{tpu_custom_call.1} parent=31 // pred_check_branch
          %183 = sbr.rel (%p181) target = $region40
        $region39: #{tpu_custom_call.1} parent=31 // pred_region
          %184 = dma.done [#allocation7], 16384
        $region40: #{tpu_custom_call.1} parent=31 // pred_fallthru
          _
        %p185 = pneg %p38
        %p186 = pneg %p35
        %s187 = sand.u32 %s51, 1
        %s188 = scalar_lea.sflag [#allocation4], %s187
        %s189 = sand.u32 %s51, 1
        %s190 = smul.addr %s189, 8
        %s191 = scalar_lea.vmem [#allocation3], %s190
        %p192 = pneg %p64
        %p193 = pneg %p61
        %p194 = pneg %p85
        %p195 = pneg %p82
        %p196 = pneg %p111
        %p197 = pneg %p108
        %s198 = sand.u32 %s98, 1
        %s199 = scalar_lea.sflag [#allocation5], %s198
        %s200 = sand.u32 %s98, 1
        %s201 = smul.addr %s200, 8
        %s202 = scalar_lea.vmem [#allocation8], %s201
        %v203 = vld [vmem:[%s176] sm:$0xff]
        %v205 = vcombine.high %v203, %v203
        %vm207 = vcmask 1043456
        %v208 = vsel %vm207, %v203, -inf
        %v209 = vrot.slane %v208, 4
        %v210 = vmax.f32 %v208, %v209
        %v211 = vrot.slane %v210, 2
        %v212 = vmax.f32 %v210, %v211
        %v213 = vrot.slane %v212, 1
        %v214 = vmax.f32 %v212, %v213
        %v215 = vsel %vm207, %v205, -inf
        %v216 = vrot.slane %v215, 4
        %v217 = vmax.f32 %v215, %v216
        %v218 = vrot.slane %v217, 2
        %v219 = vmax.f32 %v217, %v218
        %v220 = vrot.slane %v219, 1
        %v221 = vmax.f32 %v219, %v220
        %v222 = vsel %vm207, %v203, 0.0
        %v223 = vrot.slane %v222, 4
        %v224 = vadd.f32 %v222, %v223
        %v225 = vrot.slane %v224, 2
        %v226 = vadd.f32 %v224, %v225
        %v227 = vrot.slane %v226, 1
        %v228 = vadd.f32 %v226, %v227
        %v229 = vsel %vm207, %v205, 0.0
        %v230 = vrot.slane %v229, 4
        %v231 = vadd.f32 %v229, %v230
        %v232 = vrot.slane %v231, 2
        %v233 = vadd.f32 %v231, %v232
        %v234 = vrot.slane %v233, 1
        %v235 = vadd.f32 %v233, %v234
        %v236 = vmul.f32 %v228, 0.25
        %v237 = vmul.f32 %v235, 0.25
        %v238 = vld [vmem:[#allocation6] sm:$0xff]
        %v239 = vld [vmem:[#allocation6 + $0x8] sm:$0xff]
        %v240 = vld [vmem:[#allocation6 + $0x10] sm:$0xff]
        %v241 = vld [vmem:[#allocation6 + $0x18] sm:$0xff]
        %v242 = vld [vmem:[#allocation6 + $0x20] sm:$0xff]
        %v243 = vld [vmem:[#allocation6 + $0x28] sm:$0xff]
        %v244 = vld [vmem:[#allocation6 + $0x30] sm:$0xff]
        %v245 = vld [vmem:[#allocation6 + $0x38] sm:$0xff]
        %v246 = vld [vmem:[#allocation6 + $0x40] sm:$0xff]
        %v247 = vld [vmem:[#allocation6 + $0x48] sm:$0xff]
        %v248 = vld [vmem:[#allocation6 + $0x50] sm:$0xff]
        %v249 = vld [vmem:[#allocation6 + $0x58] sm:$0xff]
        %v250 = vld [vmem:[#allocation6 + $0x60] sm:$0xff]
        %v251 = vld [vmem:[#allocation6 + $0x68] sm:$0xff]
        %v252 = vld [vmem:[#allocation6 + $0x70] sm:$0xff]
        %v253 = vld [vmem:[#allocation6 + $0x78] sm:$0xff]
        %v254 = vld [vmem:[#allocation6 + $0x80] sm:$0xff]
        %v255 = vld [vmem:[#allocation6 + $0x88] sm:$0xff]
        %v256 = vld [vmem:[#allocation6 + $0x90] sm:$0xff]
        %v257 = vld [vmem:[#allocation6 + $0x98] sm:$0xff]
        %v258 = vld [vmem:[#allocation6 + $0xa0] sm:$0xff]
        %v259 = vld [vmem:[#allocation6 + $0xa8] sm:$0xff]
        %v260 = vld [vmem:[#allocation6 + $0xb0] sm:$0xff]
        %v261 = vld [vmem:[#allocation6 + $0xb8] sm:$0xff]
        %v262 = vld [vmem:[#allocation6 + $0xc0] sm:$0xff]
        %v263 = vld [vmem:[#allocation6 + $0xc8] sm:$0xff]
        %v264 = vld [vmem:[#allocation6 + $0xd0] sm:$0xff]
        %v265 = vld [vmem:[#allocation6 + $0xd8] sm:$0xff]
        %v266 = vld [vmem:[#allocation6 + $0xe0] sm:$0xff]
        %v267 = vld [vmem:[#allocation6 + $0xe8] sm:$0xff]
        %v268 = vld [vmem:[#allocation6 + $0xf0] sm:$0xff]
        %v269 = vld [vmem:[#allocation6 + $0xf8] sm:$0xff]
        %v270 = vld [vmem:[#allocation6 + $0x100] sm:$0xff]
        %v271 = vld [vmem:[#allocation6 + $0x108] sm:$0xff]
        %v272 = vld [vmem:[#allocation6 + $0x110] sm:$0xff]
        %v273 = vld [vmem:[#allocation6 + $0x118] sm:$0xff]
        %v274 = vld [vmem:[#allocation6 + $0x120] sm:$0xff]
        %v275 = vld [vmem:[#allocation6 + $0x128] sm:$0xff]
        %v276 = vld [vmem:[#allocation6 + $0x130] sm:$0xff]
        %v277 = vld [vmem:[#allocation6 + $0x138] sm:$0xff]
        %v278 = vld [vmem:[#allocation6 + $0x140] sm:$0xff]
        %v279 = vld [vmem:[#allocation6 + $0x148] sm:$0xff]
        %v280 = vld [vmem:[#allocation6 + $0x150] sm:$0xff]
        %v281 = vld [vmem:[#allocation6 + $0x158] sm:$0xff]
        %v282 = vld [vmem:[#allocation6 + $0x160] sm:$0xff]
        %v283 = vld [vmem:[#allocation6 + $0x168] sm:$0xff]
        %v284 = vld [vmem:[#allocation6 + $0x170] sm:$0xff]
        %v285 = vld [vmem:[#allocation6 + $0x178] sm:$0xff]
        %v286 = vld [vmem:[#allocation6 + $0x180] sm:$0xff]
        %v287 = vld [vmem:[#allocation6 + $0x188] sm:$0xff]
        %v288 = vld [vmem:[#allocation6 + $0x190] sm:$0xff]
        %v289 = vld [vmem:[#allocation6 + $0x198] sm:$0xff]
        %v290 = vld [vmem:[#allocation6 + $0x1a0] sm:$0xff]
        %v291 = vld [vmem:[#allocation6 + $0x1a8] sm:$0xff]
        %v292 = vld [vmem:[#allocation6 + $0x1b0] sm:$0xff]
        %v293 = vld [vmem:[#allocation6 + $0x1b8] sm:$0xff]
        %v294 = vld [vmem:[#allocation6 + $0x1c0] sm:$0xff]
        %v295 = vld [vmem:[#allocation6 + $0x1c8] sm:$0xff]
        %v296 = vld [vmem:[#allocation6 + $0x1d0] sm:$0xff]
        %v297 = vld [vmem:[#allocation6 + $0x1d8] sm:$0xff]
        %v298 = vld [vmem:[#allocation6 + $0x1e0] sm:$0xff]
        %v299 = vld [vmem:[#allocation6 + $0x1e8] sm:$0xff]
        %v300 = vld [vmem:[#allocation6 + $0x1f0] sm:$0xff]
        %v301 = vld [vmem:[#allocation6 + $0x1f8] sm:$0xff]
        %s302 = scalar_lea.vmem [#allocation6], 512
        %v303 = vld [vmem:[%s302] sm:$0xff]
        %v304 = vld [vmem:[%s302 + $0x8] sm:$0xff]
        %v305 = vld [vmem:[%s302 + $0x10] sm:$0xff]
        %v306 = vld [vmem:[%s302 + $0x18] sm:$0xff]
        %v307 = vld [vmem:[%s302 + $0x20] sm:$0xff]
        %v308 = vld [vmem:[%s302 + $0x28] sm:$0xff]
        %v309 = vld [vmem:[%s302 + $0x30] sm:$0xff]
        %v310 = vld [vmem:[%s302 + $0x38] sm:$0xff]
        %v311 = vld [vmem:[%s302 + $0x40] sm:$0xff]
        %v312 = vld [vmem:[%s302 + $0x48] sm:$0xff]
        %v313 = vld [vmem:[%s302 + $0x50] sm:$0xff]
        %v314 = vld [vmem:[%s302 + $0x58] sm:$0xff]
        %v315 = vld [vmem:[%s302 + $0x60] sm:$0xff]
        %v316 = vld [vmem:[%s302 + $0x68] sm:$0xff]
        %v317 = vld [vmem:[%s302 + $0x70] sm:$0xff]
        %v318 = vld [vmem:[%s302 + $0x78] sm:$0xff]
        %v319 = vld [vmem:[%s302 + $0x80] sm:$0xff]
        %v320 = vld [vmem:[%s302 + $0x88] sm:$0xff]
        %v321 = vld [vmem:[%s302 + $0x90] sm:$0xff]
        %v322 = vld [vmem:[%s302 + $0x98] sm:$0xff]
        %v323 = vld [vmem:[%s302 + $0xa0] sm:$0xff]
        %v324 = vld [vmem:[%s302 + $0xa8] sm:$0xff]
        %v325 = vld [vmem:[%s302 + $0xb0] sm:$0xff]
        %v326 = vld [vmem:[%s302 + $0xb8] sm:$0xff]
        %v327 = vld [vmem:[%s302 + $0xc0] sm:$0xff]
        %v328 = vld [vmem:[%s302 + $0xc8] sm:$0xff]
        %v329 = vld [vmem:[%s302 + $0xd0] sm:$0xff]
        %v330 = vld [vmem:[%s302 + $0xd8] sm:$0xff]
        %v331 = vld [vmem:[%s302 + $0xe0] sm:$0xff]
        %v332 = vld [vmem:[%s302 + $0xe8] sm:$0xff]
        %v333 = vld [vmem:[%s302 + $0xf0] sm:$0xff]
        %v334 = vld [vmem:[%s302 + $0xf8] sm:$0xff]
        %v335 = vld [vmem:[%s302 + $0x100] sm:$0xff]
        %v336 = vld [vmem:[%s302 + $0x108] sm:$0xff]
        %v337 = vld [vmem:[%s302 + $0x110] sm:$0xff]
        %v338 = vld [vmem:[%s302 + $0x118] sm:$0xff]
        %v339 = vld [vmem:[%s302 + $0x120] sm:$0xff]
        %v340 = vld [vmem:[%s302 + $0x128] sm:$0xff]
        %v341 = vld [vmem:[%s302 + $0x130] sm:$0xff]
        %v342 = vld [vmem:[%s302 + $0x138] sm:$0xff]
        %v343 = vld [vmem:[%s302 + $0x140] sm:$0xff]
        %v344 = vld [vmem:[%s302 + $0x148] sm:$0xff]
        %v345 = vld [vmem:[%s302 + $0x150] sm:$0xff]
        %v346 = vld [vmem:[%s302 + $0x158] sm:$0xff]
        %v347 = vld [vmem:[%s302 + $0x160] sm:$0xff]
        %v348 = vld [vmem:[%s302 + $0x168] sm:$0xff]
        %v349 = vld [vmem:[%s302 + $0x170] sm:$0xff]
        %v350 = vld [vmem:[%s302 + $0x178] sm:$0xff]
        %v351 = vld [vmem:[%s302 + $0x180] sm:$0xff]
        %v352 = vld [vmem:[%s302 + $0x188] sm:$0xff]
        %v353 = vld [vmem:[%s302 + $0x190] sm:$0xff]
        %v354 = vld [vmem:[%s302 + $0x198] sm:$0xff]
        %v355 = vld [vmem:[%s302 + $0x1a0] sm:$0xff]
        %v356 = vld [vmem:[%s302 + $0x1a8] sm:$0xff]
        %v357 = vld [vmem:[%s302 + $0x1b0] sm:$0xff]
        %v358 = vld [vmem:[%s302 + $0x1b8] sm:$0xff]
        %v359 = vld [vmem:[%s302 + $0x1c0] sm:$0xff]
        %v360 = vld [vmem:[%s302 + $0x1c8] sm:$0xff]
        %v361 = vld [vmem:[%s302 + $0x1d0] sm:$0xff]
        %v362 = vld [vmem:[%s302 + $0x1d8] sm:$0xff]
        %v363 = vld [vmem:[%s302 + $0x1e0] sm:$0xff]
        %v364 = vld [vmem:[%s302 + $0x1e8] sm:$0xff]
        %v365 = vld [vmem:[%s302 + $0x1f0] sm:$0xff]
        %v366 = vld [vmem:[%s302 + $0x1f8] sm:$0xff]
        %367 = vmatprep.subr.mxu0 %v334
        %368 = vmatpush1.msra.mxu0 %v333
        %369 = vmatprep.subr.mxu0 %v332
        %370 = vmatpush1.msra.mxu0 %v331
        %371 = vmatprep.subr.mxu0 %v330
        %372 = vmatpush1.msra.mxu0 %v329
        %373 = vmatprep.subr.mxu0 %v328
        %374 = vmatpush1.msra.mxu0 %v327
        %375 = vmatprep.subr.mxu0 %v326
        %376 = vmatpush1.msra.mxu0 %v325
        %377 = vmatprep.subr.mxu0 %v324
        %378 = vmatpush1.msra.mxu0 %v323
        %379 = vmatprep.subr.mxu0 %v322
        %380 = vmatpush1.msra.mxu0 %v321
        %381 = vmatprep.subr.mxu0 %v320
        %382 = vmatpush1.msra.mxu0 %v319
        %383 = vmatprep.subr.mxu0 %v318
        %384 = vmatpush1.msra.mxu0 %v317
        %385 = vmatprep.subr.mxu0 %v316
        %386 = vmatpush1.msra.mxu0 %v315
        %387 = vmatprep.subr.mxu0 %v314
        %388 = vmatpush1.msra.mxu0 %v313
        %389 = vmatprep.subr.mxu0 %v312
        %390 = vmatpush1.msra.mxu0 %v311
        %391 = vmatprep.subr.mxu0 %v310
        %392 = vmatpush1.msra.mxu0 %v309
        %393 = vmatprep.subr.mxu0 %v308
        %394 = vmatpush1.msra.mxu0 %v307
        %395 = vmatprep.subr.mxu0 %v306
        %396 = vmatpush1.msra.mxu0 %v305
        %397 = vmatprep.subr.mxu0 %v304
        %398 = vmatpush1.msra.mxu0 %v303
        %399 = vmatprep.subr.mxu0 %v366
        %400 = vmatpush2.msra.mxu0 %v365
        %401 = vmatprep.subr.mxu0 %v364
        %402 = vmatpush2.msra.mxu0 %v363
        %403 = vmatprep.subr.mxu0 %v362
        %404 = vmatpush2.msra.mxu0 %v361
        %405 = vmatprep.subr.mxu0 %v360
        %406 = vmatpush2.msra.mxu0 %v359
        %407 = vmatprep.subr.mxu0 %v358
        %408 = vmatpush2.msra.mxu0 %v357
        %409 = vmatprep.subr.mxu0 %v356
        %410 = vmatpush2.msra.mxu0 %v355
        %411 = vmatprep.subr.mxu0 %v354
        %412 = vmatpush2.msra.mxu0 %v353
        %413 = vmatprep.subr.mxu0 %v352
        %414 = vmatpush2.msra.mxu0 %v351
        %415 = vmatprep.subr.mxu0 %v350
        %416 = vmatpush2.msra.mxu0 %v349
        %417 = vmatprep.subr.mxu0 %v348
        %418 = vmatpush2.msra.mxu0 %v347
        %419 = vmatprep.subr.mxu0 %v346
        %420 = vmatpush2.msra.mxu0 %v345
        %421 = vmatprep.subr.mxu0 %v344
        %422 = vmatpush2.msra.mxu0 %v343
        %423 = vmatprep.subr.mxu0 %v342
        %424 = vmatpush2.msra.mxu0 %v341
        %425 = vmatprep.subr.mxu0 %v340
        %426 = vmatpush2.msra.mxu0 %v339
        %427 = vmatprep.subr.mxu0 %v338
        %428 = vmatpush2.msra.mxu0 %v337
        %429 = vmatprep.subr.mxu0 %v336
        %430 = vmatpush2.msra.mxu0 %v335
        %431 = vmatprep.mubr.f32.mxu0 %v237
        %432 = vmatmul.mubr.f32.gmra.mxu0 %v236
        %v433 = vpop.f32.mrf.mxu0
        %v434 = vadd.f32 0.0, %v433
        %v435 = vpop.f32.mrf.mxu0
        %v436 = vadd.f32 0.0, %v435
        %437 = vdwg.mxu0
        %438 = vmatprep.subr.mxu0 %v269
        %439 = vmatpush1.msra.mxu0 %v268
        %440 = vmatprep.subr.mxu0 %v267
        %441 = vmatpush1.msra.mxu0 %v266
        %442 = vmatprep.subr.mxu0 %v265
        %443 = vmatpush1.msra.mxu0 %v264
        %444 = vmatprep.subr.mxu0 %v263
        %445 = vmatpush1.msra.mxu0 %v262
        %446 = vmatprep.subr.mxu0 %v261
        %447 = vmatpush1.msra.mxu0 %v260
        %448 = vmatprep.subr.mxu0 %v259
        %449 = vmatpush1.msra.mxu0 %v258
        %450 = vmatprep.subr.mxu0 %v257
        %451 = vmatpush1.msra.mxu0 %v256
        %452 = vmatprep.subr.mxu0 %v255
        %453 = vmatpush1.msra.mxu0 %v254
        %454 = vmatprep.subr.mxu0 %v253
        %455 = vmatpush1.msra.mxu0 %v252
        %456 = vmatprep.subr.mxu0 %v251
        %457 = vmatpush1.msra.mxu0 %v250
        %458 = vmatprep.subr.mxu0 %v249
        %459 = vmatpush1.msra.mxu0 %v248
        %460 = vmatprep.subr.mxu0 %v247
        %461 = vmatpush1.msra.mxu0 %v246
        %462 = vmatprep.subr.mxu0 %v245
        %463 = vmatpush1.msra.mxu0 %v244
        %464 = vmatprep.subr.mxu0 %v243
        %465 = vmatpush1.msra.mxu0 %v242
        %466 = vmatprep.subr.mxu0 %v241
        %467 = vmatpush1.msra.mxu0 %v240
        %468 = vmatprep.subr.mxu0 %v239
        %469 = vmatpush1.msra.mxu0 %v238
        %470 = vmatprep.subr.mxu0 %v301
        %471 = vmatpush2.msra.mxu0 %v300
        %472 = vmatprep.subr.mxu0 %v299
        %473 = vmatpush2.msra.mxu0 %v298
        %474 = vmatprep.subr.mxu0 %v297
        %475 = vmatpush2.msra.mxu0 %v296
        %476 = vmatprep.subr.mxu0 %v295
        %477 = vmatpush2.msra.mxu0 %v294
        %478 = vmatprep.subr.mxu0 %v293
        %479 = vmatpush2.msra.mxu0 %v292
        %480 = vmatprep.subr.mxu0 %v291
        %481 = vmatpush2.msra.mxu0 %v290
        %482 = vmatprep.subr.mxu0 %v289
        %483 = vmatpush2.msra.mxu0 %v288
        %484 = vmatprep.subr.mxu0 %v287
        %485 = vmatpush2.msra.mxu0 %v286
        %486 = vmatprep.subr.mxu0 %v285
        %487 = vmatpush2.msra.mxu0 %v284
        %488 = vmatprep.subr.mxu0 %v283
        %489 = vmatpush2.msra.mxu0 %v282
        %490 = vmatprep.subr.mxu0 %v281
        %491 = vmatpush2.msra.mxu0 %v280
        %492 = vmatprep.subr.mxu0 %v279
        %493 = vmatpush2.msra.mxu0 %v278
        %494 = vmatprep.subr.mxu0 %v277
        %495 = vmatpush2.msra.mxu0 %v276
        %496 = vmatprep.subr.mxu0 %v275
        %497 = vmatpush2.msra.mxu0 %v274
        %498 = vmatprep.subr.mxu0 %v273
        %499 = vmatpush2.msra.mxu0 %v272
        %500 = vmatprep.subr.mxu0 %v271
        %501 = vmatpush2.msra.mxu0 %v270
        %502 = vmatprep.mubr.f32.mxu0 %v221
        %503 = vmatmul.mubr.f32.gmra.mxu0 %v214
        %v504 = vpop.f32.mrf.mxu0
        %v505 = vadd.f32 %v434, %v504
        %v506 = vpop.f32.mrf.mxu0
        %v507 = vadd.f32 %v436, %v506
        %508 = vdwg.mxu0
        %s509 = sld [smem:[#allocation2]]
        %v510 = vstv %s509
        %v511 = vadd.f32 %v505, %v510
        %v512 = vadd.f32 %v507, %v510
        %v513 = vxor.u32 %v511, 2147483648
        %v514 = vxor.u32 %v512, 2147483648
        %v515 = vmul.f32 %v513, 1.442695
        %v516 = vpow.pop %v515
        %v517 = vmul.f32 %v514, 1.442695
        %v518 = vpow.pop %v517
        %v519 = vadd.f32 %v516, 1.0
        %v520 = vadd.f32 %v518, 1.0
        %v521 = vrcp.pop %v519
        %v522 = vmul.f32 1.0, %v521
        %v523 = vrcp.pop %v520
        %v524 = vmul.f32 1.0, %v523
        %v525 = vlaneseq
        %v526 = vshrl.u32 %v525, 7
        %v527 = vsub.s32 0, %v526
        %v528 = vrot.slane %v522, %v527
        %v529 = vlaneseq
        %v530 = vshrl.u32 %v529, 7
        %v531 = vsub.s32 0, %v530
        %v532 = vrot.slane %v524, %v531
        %v535 = vcombine.low %v528, %v532
        %v537 = vmul.f32 %v203, %v535
        %538 = vst [vmem:[%s202] sm:$0xff] %v537
        %s539 = sand.u32 %s98, 1
        %s540 = scalar_lea.sflag [#allocation5], %s539
        %s541 = sand.u32 %s98, 1
        %s542 = smul.addr %s541, 8
        %s543 = scalar_lea.vmem [#allocation8], %s542
        // Predicated region
        $region41: #{tpu_custom_call.1} parent=31 // pred_check
          %p544 = pneg %p108
        $region42: #{tpu_custom_call.1} parent=31 // pred_check_branch
          %546 = sbr.rel (%p544) target = $region44
        $region43: #{tpu_custom_call.1} parent=31 // pred_region
          %s548 = ssub.s32 128, 128
          %549 = vsyncadd %s540, %s548
          %s550 = smul.addr %s22, 2
          %s551 = smul.addr %s550, 64
          %s552 = scalar_lea.hbm %s3, %s551
          %s554 = sshll.u32 %s543, 4
          %s555 = int_to_ptr.vmem [resolvable:$true] %s554
          %557 = dma.vmem_to_hbm [thread:$0]  %s555, 128, %s552, %s540
        $region44: #{tpu_custom_call.1} parent=31 // pred_fallthru
          _
      $region32: #{tpu_custom_call.1} parent=5 // pred_fallthru
        _
      %p558 = scmp.le.s32.totalorder 2, %s17
      // Predicated region
      $region45: #{tpu_custom_call.1} parent=5 // pred_check
        %p559 = pneg %p558
      $region46: #{tpu_custom_call.1} parent=5 // pred_check_branch
        %561 = sbr.rel (%p559) target = $region48
      $region47: #{tpu_custom_call.1} parent=5 // pred_region
        %s562 = ssub.s32 %s17, 2
        // Predicated region
        $region49: #{tpu_custom_call.1} parent=47 // pred_check
          %p563 = pneg %p114
        $region50: #{tpu_custom_call.1} parent=47 // pred_check_branch
          %565 = sbr.rel (%p563) target = $region52
        $region51: #{tpu_custom_call.1} parent=47 // pred_region
          %s566 = sand.u32 %s99, 1
          %s567 = scalar_lea.sflag [#allocation5], %s566
          %s568 = sand.u32 %s99, 1
          %s569 = smul.addr %s568, 8
          %s570 = scalar_lea.vmem [#allocation8], %s569
          %571 = dma.done %s567, 128
        $region52: #{tpu_custom_call.1} parent=47 // pred_fallthru
          _
      $region48: #{tpu_custom_call.1} parent=5 // pred_fallthru
        _
    $region6: #{tpu_custom_call.1} parent=1 // loop_footer
      %s21 = sadd.s32 1, %s17
    $region7: #{tpu_custom_call.1} parent=1 // loop_footer_branch
      %16 = sbr.rel target = $region3
    $region8: #{tpu_custom_call.1} parent=1 // loop_exit
      _
    %572 = vsyncpa [#allocation4], 1
    %s573 = scalar_lea.sflag [#allocation4], 1
    %574 = vsyncpa %s573, 1
    %575 = vsyncpa [#allocation7], 1
    %576 = vsyncpa [#allocation5], 1
    %s577 = scalar_lea.sflag [#allocation5], 1
    %578 = vsyncpa %s577, 1

</llo_original>
